<compile_context>
chip_gen: v5e
topology: v5e:2x2
jax: 0.10.0
libtpu: 0.0.40
codegen_flags: <defaults>
</compile_context>

<pallas_src>
import jax
import jax.numpy as jnp
from jax.experimental import pallas as pl
from jax.experimental.pallas import tpu as pltpu


def _outconv_kernel(w_ref, b_ref, x_ref, o_ref):
    """w_ref: (C_out, C_in) SMEM, b_ref: (C_out,) SMEM,
    x_ref: (TB, C_in, tile_hw) VMEM, o_ref: (TB, C_out, tile_hw) VMEM."""
    c_out, c_in = w_ref.shape
    tb = x_ref.shape[0]

    def body(i, carry):
        # Stream one batch row at a time; per-iteration live set is only
        # ~(1 + tile_hw/1024) vregs, independent of TB.
        for co in range(c_out):                      # static unroll (C_out small)
            acc = x_ref[i, 0:1, :] * w_ref[co, 0] + b_ref[co]
            for ci in range(1, c_in):                # VPU broadcast-FMAs
                acc = acc + x_ref[i, ci:ci + 1, :] * w_ref[co, ci]
            o_ref[i, co:co + 1, :] = acc.astype(o_ref.dtype)
        return carry

    jax.lax.fori_loop(0, tb, body, 0, unroll=True)


def outconv_forward(x, weight, bias, *, max_tile_hw=2048,
                    target_step_bytes=2 * 1024 * 1024):
    """Multi-step OutConv forward.

    x:      [T, N, C_in, H, W]  (PyTorch NCHW per time-step, step_mode='m')
    weight: [C_out, C_in, 1, 1] (PyTorch Conv2d weight)
    bias:   [C_out]
    returns [T, N, C_out, H, W]
    """
    T, N, C_in, H, W = x.shape
    C_out = weight.shape[0]
    TN = T * N
    HW = H * W

    # Free, metadata-only reshapes (merging contiguous row-major dims).
    x_flat = x.reshape(TN, C_in, HW)
    w2d = weight.reshape(C_out, C_in)

    # Pad pixels to a multiple of 128: every tile is lane-dense (unmasked vst)
    # and a non-128-multiple H*W can never force a full-dim VMEM block.
    HW_pad = ((HW + 127) // 128) * 128
    if HW_pad != HW:
        x_flat = jnp.pad(x_flat, ((0, 0), (0, 0), (0, HW_pad - HW)))

    itemsize = jnp.dtype(x.dtype).itemsize

    # Lane tile: as wide as possible up to max_tile_hw (both multiples of 128).
    tile_hw = min(HW_pad, max_tile_hw)

    # Batch tile: fold enough of T*N into each block that one grid step moves
    # ~target_step_bytes (input + output), amortizing the ~0.35us/step
    # pipeline overhead.  Double-buffered footprint ~2*target -> ~4 MiB.
    bytes_per_batch_row = (C_in + C_out) * tile_hw * itemsize
    TB = int(max(1, target_step_bytes // bytes_per_batch_row))
    TB = min(TB, TN)

    n_hw = pl.cdiv(HW_pad, tile_hw)
    n_b = pl.cdiv(TN, TB)
    # Keep >=2 grid steps when possible so v7x's 2 TensorCores both get work.
    if n_b * n_hw < 2 and TN > 1:
        TB = pl.cdiv(TN, 2)
        n_b = pl.cdiv(TN, TB)

    # Larger-extent parallel axis first.
    if n_b >= n_hw:
        grid = (n_b, n_hw)
        idx_map = lambda b, p: (b, 0, p)
    else:
        grid = (n_hw, n_b)
        idx_map = lambda p, b: (b, 0, p)

    w_itemsize = jnp.dtype(weight.dtype).itemsize
    cost = pl.CostEstimate(
        flops=2 * TN * HW * C_in * C_out,
        transcendentals=0,
        bytes_accessed=TN * HW * (C_in + C_out) * itemsize
        + (C_in * C_out + C_out) * w_itemsize,
    )

    out_flat = pl.pallas_call(
        _outconv_kernel,
        out_shape=jax.ShapeDtypeStruct((TN, C_out, HW_pad), x.dtype),
        grid_spec=pltpu.PrefetchScalarGridSpec(
            num_scalar_prefetch=0,
            grid=grid,
            in_specs=[
                # Tiny weight / bias live entirely in SMEM (scalar reads feed
                # the VPU broadcast-multiplies; no 2/4-lane VMEM blocks).
                pl.BlockSpec(memory_space=pltpu.MemorySpace.SMEM),
                pl.BlockSpec(memory_space=pltpu.MemorySpace.SMEM),
                # x: (TB, C_in, tile_hw) per step — batch rows folded in,
                # channels on sublanes, pixels lane-dense.
                pl.BlockSpec((TB, C_in, tile_hw), idx_map),
            ],
            out_specs=pl.BlockSpec((TB, C_out, tile_hw), idx_map),
        ),
        compiler_params=pltpu.CompilerParams(
            dimension_semantics=("parallel", "parallel"),
        ),
        cost_estimate=cost,
    )(w2d, bias, x_flat)

    if HW_pad != HW:
        out_flat = out_flat[:, :, :HW]
    # Free reshape: split contiguous dims back out.
    return out_flat.reshape(T, N, C_out, H, W)


if __name__ == "__main__":
    # Small deterministic example: T=2, N=2, C_in=4, H=W=16, C_out=2.
    T, N, C_in, H, W = 2, 2, 4, 16, 16
    C_out = 2

    key = jax.random.PRNGKey(0)
    kx, kw, kb = jax.random.split(key, 3)

    x = jax.random.normal(kx, (T, N, C_in, H, W), dtype=jnp.float32)

    # PyTorch Conv2d default init: kaiming_uniform(a=sqrt(5)) -> U(-bound, bound)
    # with bound = 1/sqrt(fan_in); same bound for bias. fan_in = C_in * 1 * 1.
    bound = 1.0 / jnp.sqrt(jnp.float32(C_in))
    weight = jax.random.uniform(kw, (C_out, C_in, 1, 1), jnp.float32, -bound, bound)
    bias = jax.random.uniform(kb, (C_out,), jnp.float32, -bound, bound)

    out = outconv_forward(x, weight, bias)
    jax.block_until_ready(out)

    # Reference check (plain JAX) to validate kernel semantics.
    ref = (
        jnp.einsum("tnchw,oc->tnohw", x, weight.reshape(C_out, C_in))
        + bias.reshape(1, 1, C_out, 1, 1)
    )
    assert out.shape == (T, N, C_out, H, W)
    assert jnp.allclose(out, ref, atol=1e-5, rtol=1e-5)

    print("KERNEL_OK")
</pallas_src>

<mosaic_0001>
module attributes {stable_mosaic.version = 11 : i64} {
  func.func @_outconv_kernel(%arg0: i32, %arg1: i32, %arg2: memref<2x4xf32, #tpu.memory_space<smem>>, %arg3: memref<2xf32, #tpu.memory_space<smem>>, %arg4: memref<2x4x256xf32, #tpu.memory_space<vmem>>, %arg5: memref<2x2x256xf32, #tpu.memory_space<vmem>>) attributes {dimension_semantics = [#tpu.dimension_semantics<parallel>, #tpu.dimension_semantics<parallel>], iteration_bounds = array<i64: 2, 1>, scalar_prefetch = 0 : i64, scratch_operands = 0 : i64, tpu.core_type = #tpu.core_type<tc>, window_params = [{transform_indices = @transform_0, window_bounds = array<i64: 2, 4>}, {transform_indices = @transform_1, window_bounds = array<i64: 2>}, {transform_indices = @transform_2, window_bounds = array<i64: 2, 4, 256>}, {transform_indices = @transform_3, window_bounds = array<i64: 2, 2, 256>}]} {
    %c0_i32 = arith.constant 0 : i32
    %0 = arith.index_cast %c0_i32 : i32 to index
    %c0 = arith.constant 0 : index
    %c0_0 = arith.constant 0 : index
    %1 = vector.load %arg4[%0, %c0, %c0_0] : memref<2x4x256xf32, #tpu.memory_space<vmem>>, vector<1x1x256xf32>
    %2 = vector.shape_cast %1 : vector<1x1x256xf32> to vector<1x256xf32>
    %c0_1 = arith.constant 0 : index
    %c0_2 = arith.constant 0 : index
    %3 = memref.load %arg2[%c0_1, %c0_2] : memref<2x4xf32, #tpu.memory_space<smem>>
    %4 = vector.broadcast %3 : f32 to vector<1x256xf32>
    %5 = arith.mulf %2, %4 : vector<1x256xf32>
    %c0_3 = arith.constant 0 : index
    %6 = memref.load %arg3[%c0_3] : memref<2xf32, #tpu.memory_space<smem>>
    %7 = vector.broadcast %6 : f32 to vector<1x256xf32>
    %8 = arith.addf %5, %7 : vector<1x256xf32>
    %9 = arith.index_cast %c0_i32 : i32 to index
    %c1 = arith.constant 1 : index
    %c0_4 = arith.constant 0 : index
    %10 = vector.load %arg4[%9, %c1, %c0_4] : memref<2x4x256xf32, #tpu.memory_space<vmem>>, vector<1x1x256xf32>
    %11 = vector.shape_cast %10 : vector<1x1x256xf32> to vector<1x256xf32>
    %c0_5 = arith.constant 0 : index
    %c1_6 = arith.constant 1 : index
    %12 = memref.load %arg2[%c0_5, %c1_6] : memref<2x4xf32, #tpu.memory_space<smem>>
    %13 = vector.broadcast %12 : f32 to vector<1x256xf32>
    %14 = arith.mulf %11, %13 : vector<1x256xf32>
    %15 = arith.addf %8, %14 : vector<1x256xf32>
    %16 = arith.index_cast %c0_i32 : i32 to index
    %c2 = arith.constant 2 : index
    %c0_7 = arith.constant 0 : index
    %17 = vector.load %arg4[%16, %c2, %c0_7] : memref<2x4x256xf32, #tpu.memory_space<vmem>>, vector<1x1x256xf32>
    %18 = vector.shape_cast %17 : vector<1x1x256xf32> to vector<1x256xf32>
    %c0_8 = arith.constant 0 : index
    %c2_9 = arith.constant 2 : index
    %19 = memref.load %arg2[%c0_8, %c2_9] : memref<2x4xf32, #tpu.memory_space<smem>>
    %20 = vector.broadcast %19 : f32 to vector<1x256xf32>
    %21 = arith.mulf %18, %20 : vector<1x256xf32>
    %22 = arith.addf %15, %21 : vector<1x256xf32>
    %23 = arith.index_cast %c0_i32 : i32 to index
    %c3 = arith.constant 3 : index
    %c0_10 = arith.constant 0 : index
    %24 = vector.load %arg4[%23, %c3, %c0_10] : memref<2x4x256xf32, #tpu.memory_space<vmem>>, vector<1x1x256xf32>
    %25 = vector.shape_cast %24 : vector<1x1x256xf32> to vector<1x256xf32>
    %c0_11 = arith.constant 0 : index
    %c3_12 = arith.constant 3 : index
    %26 = memref.load %arg2[%c0_11, %c3_12] : memref<2x4xf32, #tpu.memory_space<smem>>
    %27 = vector.broadcast %26 : f32 to vector<1x256xf32>
    %28 = arith.mulf %25, %27 : vector<1x256xf32>
    %29 = arith.addf %22, %28 : vector<1x256xf32>
    %30 = arith.index_cast %c0_i32 : i32 to index
    %c0_13 = arith.constant 0 : index
    %c0_14 = arith.constant 0 : index
    %31 = vector.load %arg5[%30, %c0_13, %c0_14] : memref<2x2x256xf32, #tpu.memory_space<vmem>>, vector<1x1x256xf32>
    %32 = vector.shape_cast %31 : vector<1x1x256xf32> to vector<1x256xf32>
    %33 = vector.shape_cast %29 : vector<1x256xf32> to vector<1x1x256xf32>
    tpu.vector_store %arg5[%30, %c0_13, %c0_14], %33 {strides = array<i32>} : memref<2x2x256xf32, #tpu.memory_space<vmem>>, vector<1x1x256xf32>,
    %34 = arith.index_cast %c0_i32 : i32 to index
    %c0_15 = arith.constant 0 : index
    %c0_16 = arith.constant 0 : index
    %35 = vector.load %arg4[%34, %c0_15, %c0_16] : memref<2x4x256xf32, #tpu.memory_space<vmem>>, vector<1x1x256xf32>
    %36 = vector.shape_cast %35 : vector<1x1x256xf32> to vector<1x256xf32>
    %c1_17 = arith.constant 1 : index
    %c0_18 = arith.constant 0 : index
    %37 = memref.load %arg2[%c1_17, %c0_18] : memref<2x4xf32, #tpu.memory_space<smem>>
    %38 = vector.broadcast %37 : f32 to vector<1x256xf32>
    %39 = arith.mulf %36, %38 : vector<1x256xf32>
    %c1_19 = arith.constant 1 : index
    %40 = memref.load %arg3[%c1_19] : memref<2xf32, #tpu.memory_space<smem>>
    %41 = vector.broadcast %40 : f32 to vector<1x256xf32>
    %42 = arith.addf %39, %41 : vector<1x256xf32>
    %43 = arith.index_cast %c0_i32 : i32 to index
    %c1_20 = arith.constant 1 : index
    %c0_21 = arith.constant 0 : index
    %44 = vector.load %arg4[%43, %c1_20, %c0_21] : memref<2x4x256xf32, #tpu.memory_space<vmem>>, vector<1x1x256xf32>
    %45 = vector.shape_cast %44 : vector<1x1x256xf32> to vector<1x256xf32>
    %c1_22 = arith.constant 1 : index
    %c1_23 = arith.constant 1 : index
    %46 = memref.load %arg2[%c1_22, %c1_23] : memref<2x4xf32, #tpu.memory_space<smem>>
    %47 = vector.broadcast %46 : f32 to vector<1x256xf32>
    %48 = arith.mulf %45, %47 : vector<1x256xf32>
    %49 = arith.addf %42, %48 : vector<1x256xf32>
    %50 = arith.index_cast %c0_i32 : i32 to index
    %c2_24 = arith.constant 2 : index
    %c0_25 = arith.constant 0 : index
    %51 = vector.load %arg4[%50, %c2_24, %c0_25] : memref<2x4x256xf32, #tpu.memory_space<vmem>>, vector<1x1x256xf32>
    %52 = vector.shape_cast %51 : vector<1x1x256xf32> to vector<1x256xf32>
    %c1_26 = arith.constant 1 : index
    %c2_27 = arith.constant 2 : index
    %53 = memref.load %arg2[%c1_26, %c2_27] : memref<2x4xf32, #tpu.memory_space<smem>>
    %54 = vector.broadcast %53 : f32 to vector<1x256xf32>
    %55 = arith.mulf %52, %54 : vector<1x256xf32>
    %56 = arith.addf %49, %55 : vector<1x256xf32>
    %57 = arith.index_cast %c0_i32 : i32 to index
    %c3_28 = arith.constant 3 : index
    %c0_29 = arith.constant 0 : index
    %58 = vector.load %arg4[%57, %c3_28, %c0_29] : memref<2x4x256xf32, #tpu.memory_space<vmem>>, vector<1x1x256xf32>
    %59 = vector.shape_cast %58 : vector<1x1x256xf32> to vector<1x256xf32>
    %c1_30 = arith.constant 1 : index
    %c3_31 = arith.constant 3 : index
    %60 = memref.load %arg2[%c1_30, %c3_31] : memref<2x4xf32, #tpu.memory_space<smem>>
    %61 = vector.broadcast %60 : f32 to vector<1x256xf32>
    %62 = arith.mulf %59, %61 : vector<1x256xf32>
    %63 = arith.addf %56, %62 : vector<1x256xf32>
    %64 = arith.index_cast %c0_i32 : i32 to index
    %c1_32 = arith.constant 1 : index
    %c0_33 = arith.constant 0 : index
    %65 = vector.load %arg5[%64, %c1_32, %c0_33] : memref<2x2x256xf32, #tpu.memory_space<vmem>>, vector<1x1x256xf32>
    %66 = vector.shape_cast %65 : vector<1x1x256xf32> to vector<1x256xf32>
    %67 = vector.shape_cast %63 : vector<1x256xf32> to vector<1x1x256xf32>
    tpu.vector_store %arg5[%64, %c1_32, %c0_33], %67 {strides = array<i32>} : memref<2x2x256xf32, #tpu.memory_space<vmem>>, vector<1x1x256xf32>,
    %c1_i32 = arith.constant 1 : i32
    %68 = arith.index_cast %c1_i32 : i32 to index
    %c0_34 = arith.constant 0 : index
    %c0_35 = arith.constant 0 : index
    %69 = vector.load %arg4[%68, %c0_34, %c0_35] : memref<2x4x256xf32, #tpu.memory_space<vmem>>, vector<1x1x256xf32>
    %70 = vector.shape_cast %69 : vector<1x1x256xf32> to vector<1x256xf32>
    %c0_36 = arith.constant 0 : index
    %c0_37 = arith.constant 0 : index
    %71 = memref.load %arg2[%c0_36, %c0_37] : memref<2x4xf32, #tpu.memory_space<smem>>
    %72 = vector.broadcast %71 : f32 to vector<1x256xf32>
    %73 = arith.mulf %70, %72 : vector<1x256xf32>
    %c0_38 = arith.constant 0 : index
    %74 = memref.load %arg3[%c0_38] : memref<2xf32, #tpu.memory_space<smem>>
    %75 = vector.broadcast %74 : f32 to vector<1x256xf32>
    %76 = arith.addf %73, %75 : vector<1x256xf32>
    %77 = arith.index_cast %c1_i32 : i32 to index
    %c1_39 = arith.constant 1 : index
    %c0_40 = arith.constant 0 : index
    %78 = vector.load %arg4[%77, %c1_39, %c0_40] : memref<2x4x256xf32, #tpu.memory_space<vmem>>, vector<1x1x256xf32>
    %79 = vector.shape_cast %78 : vector<1x1x256xf32> to vector<1x256xf32>
    %c0_41 = arith.constant 0 : index
    %c1_42 = arith.constant 1 : index
    %80 = memref.load %arg2[%c0_41, %c1_42] : memref<2x4xf32, #tpu.memory_space<smem>>
    %81 = vector.broadcast %80 : f32 to vector<1x256xf32>
    %82 = arith.mulf %79, %81 : vector<1x256xf32>
    %83 = arith.addf %76, %82 : vector<1x256xf32>
    %84 = arith.index_cast %c1_i32 : i32 to index
    %c2_43 = arith.constant 2 : index
    %c0_44 = arith.constant 0 : index
    %85 = vector.load %arg4[%84, %c2_43, %c0_44] : memref<2x4x256xf32, #tpu.memory_space<vmem>>, vector<1x1x256xf32>
    %86 = vector.shape_cast %85 : vector<1x1x256xf32> to vector<1x256xf32>
    %c0_45 = arith.constant 0 : index
    %c2_46 = arith.constant 2 : index
    %87 = memref.load %arg2[%c0_45, %c2_46] : memref<2x4xf32, #tpu.memory_space<smem>>
    %88 = vector.broadcast %87 : f32 to vector<1x256xf32>
    %89 = arith.mulf %86, %88 : vector<1x256xf32>
    %90 = arith.addf %83, %89 : vector<1x256xf32>
    %91 = arith.index_cast %c1_i32 : i32 to index
    %c3_47 = arith.constant 3 : index
    %c0_48 = arith.constant 0 : index
    %92 = vector.load %arg4[%91, %c3_47, %c0_48] : memref<2x4x256xf32, #tpu.memory_space<vmem>>, vector<1x1x256xf32>
    %93 = vector.shape_cast %92 : vector<1x1x256xf32> to vector<1x256xf32>
    %c0_49 = arith.constant 0 : index
    %c3_50 = arith.constant 3 : index
    %94 = memref.load %arg2[%c0_49, %c3_50] : memref<2x4xf32, #tpu.memory_space<smem>>
    %95 = vector.broadcast %94 : f32 to vector<1x256xf32>
    %96 = arith.mulf %93, %95 : vector<1x256xf32>
    %97 = arith.addf %90, %96 : vector<1x256xf32>
    %98 = arith.index_cast %c1_i32 : i32 to index
    %c0_51 = arith.constant 0 : index
    %c0_52 = arith.constant 0 : index
    %99 = vector.load %arg5[%98, %c0_51, %c0_52] : memref<2x2x256xf32, #tpu.memory_space<vmem>>, vector<1x1x256xf32>
    %100 = vector.shape_cast %99 : vector<1x1x256xf32> to vector<1x256xf32>
    %101 = vector.shape_cast %97 : vector<1x256xf32> to vector<1x1x256xf32>
    tpu.vector_store %arg5[%98, %c0_51, %c0_52], %101 {strides = array<i32>} : memref<2x2x256xf32, #tpu.memory_space<vmem>>, vector<1x1x256xf32>,
    %102 = arith.index_cast %c1_i32 : i32 to index
    %c0_53 = arith.constant 0 : index
    %c0_54 = arith.constant 0 : index
    %103 = vector.load %arg4[%102, %c0_53, %c0_54] : memref<2x4x256xf32, #tpu.memory_space<vmem>>, vector<1x1x256xf32>
    %104 = vector.shape_cast %103 : vector<1x1x256xf32> to vector<1x256xf32>
    %c1_55 = arith.constant 1 : index
    %c0_56 = arith.constant 0 : index
    %105 = memref.load %arg2[%c1_55, %c0_56] : memref<2x4xf32, #tpu.memory_space<smem>>
    %106 = vector.broadcast %105 : f32 to vector<1x256xf32>
    %107 = arith.mulf %104, %106 : vector<1x256xf32>
    %c1_57 = arith.constant 1 : index
    %108 = memref.load %arg3[%c1_57] : memref<2xf32, #tpu.memory_space<smem>>
    %109 = vector.broadcast %108 : f32 to vector<1x256xf32>
    %110 = arith.addf %107, %109 : vector<1x256xf32>
    %111 = arith.index_cast %c1_i32 : i32 to index
    %c1_58 = arith.constant 1 : index
    %c0_59 = arith.constant 0 : index
    %112 = vector.load %arg4[%111, %c1_58, %c0_59] : memref<2x4x256xf32, #tpu.memory_space<vmem>>, vector<1x1x256xf32>
    %113 = vector.shape_cast %112 : vector<1x1x256xf32> to vector<1x256xf32>
    %c1_60 = arith.constant 1 : index
    %c1_61 = arith.constant 1 : index
    %114 = memref.load %arg2[%c1_60, %c1_61] : memref<2x4xf32, #tpu.memory_space<smem>>
    %115 = vector.broadcast %114 : f32 to vector<1x256xf32>
    %116 = arith.mulf %113, %115 : vector<1x256xf32>
    %117 = arith.addf %110, %116 : vector<1x256xf32>
    %118 = arith.index_cast %c1_i32 : i32 to index
    %c2_62 = arith.constant 2 : index
    %c0_63 = arith.constant 0 : index
    %119 = vector.load %arg4[%118, %c2_62, %c0_63] : memref<2x4x256xf32, #tpu.memory_space<vmem>>, vector<1x1x256xf32>
    %120 = vector.shape_cast %119 : vector<1x1x256xf32> to vector<1x256xf32>
    %c1_64 = arith.constant 1 : index
    %c2_65 = arith.constant 2 : index
    %121 = memref.load %arg2[%c1_64, %c2_65] : memref<2x4xf32, #tpu.memory_space<smem>>
    %122 = vector.broadcast %121 : f32 to vector<1x256xf32>
    %123 = arith.mulf %120, %122 : vector<1x256xf32>
    %124 = arith.addf %117, %123 : vector<1x256xf32>
    %125 = arith.index_cast %c1_i32 : i32 to index
    %c3_66 = arith.constant 3 : index
    %c0_67 = arith.constant 0 : index
    %126 = vector.load %arg4[%125, %c3_66, %c0_67] : memref<2x4x256xf32, #tpu.memory_space<vmem>>, vector<1x1x256xf32>
    %127 = vector.shape_cast %126 : vector<1x1x256xf32> to vector<1x256xf32>
    %c1_68 = arith.constant 1 : index
    %c3_69 = arith.constant 3 : index
    %128 = memref.load %arg2[%c1_68, %c3_69] : memref<2x4xf32, #tpu.memory_space<smem>>
    %129 = vector.broadcast %128 : f32 to vector<1x256xf32>
    %130 = arith.mulf %127, %129 : vector<1x256xf32>
    %131 = arith.addf %124, %130 : vector<1x256xf32>
    %132 = arith.index_cast %c1_i32 : i32 to index
    %c1_70 = arith.constant 1 : index
    %c0_71 = arith.constant 0 : index
    %133 = vector.load %arg5[%132, %c1_70, %c0_71] : memref<2x2x256xf32, #tpu.memory_space<vmem>>, vector<1x1x256xf32>
    %134 = vector.shape_cast %133 : vector<1x1x256xf32> to vector<1x256xf32>
    %135 = vector.shape_cast %131 : vector<1x256xf32> to vector<1x1x256xf32>
    tpu.vector_store %arg5[%132, %c1_70, %c0_71], %135 {strides = array<i32>} : memref<2x2x256xf32, #tpu.memory_space<vmem>>, vector<1x1x256xf32>,
    %c2_i32 = arith.constant 2 : i32
    return
  }
  func.func @transform_0(%arg0: i32, %arg1: i32) -> (i32, i32) {
    %c0_i32 = arith.constant 0 : i32
    %c0_i32_0 = arith.constant 0 : i32
    %c0_i32_1 = arith.constant 0 : i32
    return %c0_i32, %c0_i32_0 : i32, i32
  }
  func.func @transform_1(%arg0: i32, %arg1: i32) -> i32 {
    %c0_i32 = arith.constant 0 : i32
    %c0_i32_0 = arith.constant 0 : i32
    return %c0_i32 : i32
  }
  func.func @transform_2(%arg0: i32, %arg1: i32) -> (i32, i32, i32) {
    %c0_i32 = arith.constant 0 : i32
    %c0_i32_0 = arith.constant 0 : i32
    return %arg0, %c0_i32, %arg1 : i32, i32, i32
  }
  func.func @transform_3(%arg0: i32, %arg1: i32) -> (i32, i32, i32) {
    %c0_i32 = arith.constant 0 : i32
    %c0_i32_0 = arith.constant 0 : i32
    return %arg0, %c0_i32, %arg1 : i32, i32, i32
  }
}

</mosaic_0001>

<llo_original>
// kernel: tpu_custom_call.1
$region0: #{tpu_custom_call.1}
  #allocation0 [shape = 'u32[]', space=smem, size = 0x4, offset = 0x4, fixed_abs, tag = 'smem constant byte address 0x4 - core index']
  #allocation1 [shape = 'u32[72,128]{1,0:T(1,128)}', space=vmem, size = 0x9000, scoped, tag = 'internal scratch']
  %s0 = inlined_call_operand.hbm [shape: f32[2,4], index: 0, kind: input, shape index: {}]
  %s1 = inlined_call_operand.hbm [shape: f32[2], index: 1, kind: input, shape index: {}]
  %s2 = inlined_call_operand.hbm [shape: f32[4,4,256], index: 2, kind: input, shape index: {}]
  %s3 = inlined_call_operand.hbm [shape: f32[4,2,256], index: 3, kind: output, shape index: {}]
  %s4 = sld [smem:[#allocation0]]
  $region57: #{tpu_custom_call.1} parent=0
    _
  %s6 = ssub.s32 1, %s4
  %s7 = scalar_select 0, %s6, %s4
  $region1: #{tpu_custom_call.1} parent=0
    #allocation2 [shape = 'u8[1024]{0}', space=smem, size = 0x400, scoped, tag = 'input window, operand 0, single buffered']
    #allocation3 [shape = 's32[2]{0}', space=sflag, size = 0x8, scoped, tag = 'scoped memory for tpu_custom_call.1']
    #allocation4 [shape = 's32[2]{0}', space=sflag, size = 0x8, scoped, tag = 'scoped memory for tpu_custom_call.1']
    #allocation5 [shape = 's32[2]{0}', space=sflag, size = 0x8, scoped, tag = 'scoped memory for tpu_custom_call.1']
    #allocation6 [shape = 'u8[512]{0}', space=smem, size = 0x200, scoped, tag = 'input window, operand 1, single buffered']
    #allocation7 [shape = 's32[1]{0}', space=sflag, size = 0x4, scoped, tag = 'scoped memory for tpu_custom_call.1']
    #allocation8 [shape = 'u8[16384]{0}', space=vmem, size = 0x4000, scoped, tag = 'input window, operand 2']
    #allocation9 [shape = 'u8[8192]{0}', space=vmem, size = 0x2000, scoped, tag = 'output window, operand 0']
    %8 = vsyncpa [#allocation5], 0
    %9 = vsyncpa [#allocation7], 0
    %10 = vsyncpa [#allocation3], 0
    %s11 = scalar_lea.sflag [#allocation3], 1
    %12 = vsyncpa %s11, 0
    %13 = vsyncpa [#allocation4], 0
    %s14 = scalar_lea.sflag [#allocation4], 1
    %15 = vsyncpa %s14, 0
    loop: start=0, step=1, limit=4
    $region2: #{tpu_custom_call.1} parent=1 // loop_pre_header
      _
    $region3: #{tpu_custom_call.1} parent=1 // loop_header
      %s17 = sphi 0, %s21
      %p18 = scmp.ge.s32.totalorder %s17, 4
      %s24 = sphi 0, %s36
      %s25 = sphi 0, %s32
      %s26 = sphi 0, %s24
      %s27 = sphi 0, %s25
      %s28 = sphi 0, %s26
      %s29 = sphi 0, %s27
      %s37 = sphi 0, %s37
      %s39 = sphi 0, %s37
      %s40 = sphi 0, %s39
      %s54 = sphi 0, %s40
      %s58 = sphi 0, %s58
      %s60 = sphi 0, %s58
      %s61 = sphi 0, %s60
      %s75 = sphi 0, %s61
      %s83 = sphi 0, %s85
      %s86 = sphi 0, %s83
      %s87 = sphi 0, %s86
      %s103 = sphi 0, %s87
      %s111 = sphi 0, %s113
      %s114 = sphi 0, %s111
      %s115 = sphi 0, %s114
      %s131 = sphi 0, %s115
    $region4: #{tpu_custom_call.1} parent=1 // loop_header_branch
      %20 = sbr.rel (%p18) target = $region8
    $region5: #{tpu_custom_call.1} parent=1 // loop_body
      %s22 = ssub.s32 %s17, 1
      %s23 = ssub.s32 %s17, 2
      %s30 = sadd.s32 1, %s25
      %p31 = scmp.ge.s32.totalorder %s30, 1
      %s32 = scalar_select %p31, 0, %s30
      %s33 = sadd.s32 1, %s24
      %s34 = scalar_select %p31, %s33, %s24
      %p35 = scmp.ge.s32.totalorder %s34, 2
      %s36 = scalar_select %p35, 0, %s34
      %s38 = sadd.s32 %s37, 1
      %p41 = scmp.eq.s32.totalorder %s17, 1
      %p42 = scmp.ne.s32.totalorder %s37, %s39
      %p43 = scmp.eq.s32.totalorder %s17, 0
      %p44 = por %p42, %p43
      %p45 = scmp.ne.s32.totalorder %s37, %s39
      %p46 = scmp.eq.s32.totalorder %s22, 1
      %p47 = por %p45, %p46
      %p48 = scmp.ne.s32.totalorder %s39, %s40
      %p49 = scmp.eq.s32.totalorder %s22, 0
      %p50 = por %p48, %p49
      %p51 = scmp.ne.s32.totalorder %s39, %s40
      %p52 = scmp.eq.s32.totalorder %s23, 1
      %p53 = por %p51, %p52
      %p55 = scmp.ne.s32.totalorder %s40, %s54
      %p56 = scmp.eq.s32.totalorder %s23, 0
      %p57 = por %p55, %p56
      %s59 = sadd.s32 %s58, 1
      %p62 = scmp.eq.s32.totalorder %s17, 1
      %p63 = scmp.ne.s32.totalorder %s58, %s60
      %p64 = scmp.eq.s32.totalorder %s17, 0
      %p65 = por %p63, %p64
      %p66 = scmp.ne.s32.totalorder %s58, %s60
      %p67 = scmp.eq.s32.totalorder %s22, 1
      %p68 = por %p66, %p67
      %p69 = scmp.ne.s32.totalorder %s60, %s61
      %p70 = scmp.eq.s32.totalorder %s22, 0
      %p71 = por %p69, %p70
      %p72 = scmp.ne.s32.totalorder %s60, %s61
      %p73 = scmp.eq.s32.totalorder %s23, 1
      %p74 = por %p72, %p73
      %p76 = scmp.ne.s32.totalorder %s61, %s75
      %p77 = scmp.eq.s32.totalorder %s23, 0
      %p78 = por %p76, %p77
      %s79 = ssub.s32 %s24, %s36
      %s80 = ssub.s32 %s25, %s32
      %s81 = sor.u32 %s79, %s80
      %p82 = scmp.eq.s32.totalorder %s81, 0
      %s84 = sadd.s32 %s83, 1
      %s85 = scalar_select %p82, %s83, %s84
      %p88 = pneg %p82
      %p89 = scmp.eq.s32.totalorder %s17, 1
      %p90 = por %p88, %p89
      %p91 = scmp.ne.s32.totalorder %s83, %s86
      %p92 = scmp.eq.s32.totalorder %s17, 0
      %p93 = por %p91, %p92
      %p94 = scmp.ne.s32.totalorder %s83, %s86
      %p95 = scmp.eq.s32.totalorder %s22, 1
      %p96 = por %p94, %p95
      %p97 = scmp.ne.s32.totalorder %s86, %s87
      %p98 = scmp.eq.s32.totalorder %s22, 0
      %p99 = por %p97, %p98
      %p100 = scmp.ne.s32.totalorder %s86, %s87
      %p101 = scmp.eq.s32.totalorder %s23, 1
      %p102 = por %p100, %p101
      %p104 = scmp.ne.s32.totalorder %s87, %s103
      %p105 = scmp.eq.s32.totalorder %s23, 0
      %p106 = por %p104, %p105
      %s107 = ssub.s32 %s24, %s36
      %s108 = ssub.s32 %s25, %s32
      %s109 = sor.u32 %s107, %s108
      %p110 = scmp.eq.s32.totalorder %s109, 0
      %s112 = sadd.s32 %s111, 1
      %s113 = scalar_select %p110, %s111, %s112
      %p116 = pneg %p110
      %p117 = scmp.eq.s32.totalorder %s17, 1
      %p118 = por %p116, %p117
      %p119 = scmp.ne.s32.totalorder %s111, %s114
      %p120 = scmp.eq.s32.totalorder %s17, 0
      %p121 = por %p119, %p120
      %p122 = scmp.ne.s32.totalorder %s111, %s114
      %p123 = scmp.eq.s32.totalorder %s22, 1
      %p124 = por %p122, %p123
      %p125 = scmp.ne.s32.totalorder %s114, %s115
      %p126 = scmp.eq.s32.totalorder %s22, 0
      %p127 = por %p125, %p126
      %p128 = scmp.ne.s32.totalorder %s114, %s115
      %p129 = scmp.eq.s32.totalorder %s23, 1
      %p130 = por %p128, %p129
      %p132 = scmp.ne.s32.totalorder %s115, %s131
      %p133 = scmp.eq.s32.totalorder %s23, 0
      %p134 = por %p132, %p133
      %p135 = scmp.le.s32.totalorder 1, %s17
      %p136 = scmp.lt.s32.totalorder %s17, 3
      %p137 = pnand %p135, %p136
      %p138 = pneg %p137
      // Predicated region
      $region9: #{tpu_custom_call.1} parent=5 // pred_check
        _
      $region10: #{tpu_custom_call.1} parent=5 // pred_check_branch
        %140 = sbr.rel (%p137) target = $region12
      $region11: #{tpu_custom_call.1} parent=5 // pred_region
        %s141 = ssub.s32 %s17, 1
        // Predicated region
        $region13: #{tpu_custom_call.1} parent=11 // pred_check
          %p142 = pneg %p50
        $region14: #{tpu_custom_call.1} parent=11 // pred_check_branch
          %144 = sbr.rel (%p142) target = $region16
        $region15: #{tpu_custom_call.1} parent=11 // pred_region
          %146 = vsyncadd [#allocation5], 0
          %s148 = sshll.u32 %s0, 4
          %s149 = int_to_ptr.hbm [resolvable:$true] %s148
          %151 = dma.hbm_to_smem %s149, 32, [#allocation2], [#allocation5]
        $region16: #{tpu_custom_call.1} parent=11 // pred_fallthru
          _
        // Predicated region
        $region17: #{tpu_custom_call.1} parent=11 // pred_check
          %p152 = pneg %p71
        $region18: #{tpu_custom_call.1} parent=11 // pred_check_branch
          %154 = sbr.rel (%p152) target = $region20
        $region19: #{tpu_custom_call.1} parent=11 // pred_region
          %156 = vsyncadd [#allocation7], 0
          %s158 = sshll.u32 %s1, 4
          %s159 = int_to_ptr.hbm [resolvable:$true] %s158
          %161 = dma.hbm_to_smem %s159, 16, [#allocation6], [#allocation7]
        $region20: #{tpu_custom_call.1} parent=11 // pred_fallthru
          _
      $region12: #{tpu_custom_call.1} parent=5 // pred_fallthru
        _
      %p162 = scmp.lt.s32.totalorder %s17, 2
      // Predicated region
      $region21: #{tpu_custom_call.1} parent=5 // pred_check
        %p163 = pneg %p162
      $region22: #{tpu_custom_call.1} parent=5 // pred_check_branch
        %165 = sbr.rel (%p163) target = $region24
      $region23: #{tpu_custom_call.1} parent=5 // pred_region
        // Predicated region
        $region25: #{tpu_custom_call.1} parent=23 // pred_check
          %p166 = pneg %p93
        $region26: #{tpu_custom_call.1} parent=23 // pred_check_branch
          %168 = sbr.rel (%p166) target = $region28
        $region27: #{tpu_custom_call.1} parent=23 // pred_region
          %s169 = sand.u32 %s83, 1
          %s170 = scalar_lea.sflag [#allocation3], %s169
          %s171 = sand.u32 %s83, 1
          %s172 = smul.addr %s171, 16
          %s173 = scalar_lea.vmem [#allocation8], %s172
          %s174 = smul.u32 2, %s24
          %s175 = smul.u32 2, %s25
          %177 = vsyncadd %s170, 0
          %s178 = smul.addr %s174, 2
          %s179 = sadd.s32 %s175, %s178
          %s180 = smul.addr %s179, 4
          %s181 = scalar_lea.hbm %s2, %s180
          %s182 = sshll.u32 %s181, 4
          %s183 = int_to_ptr.hbm [resolvable:$true] %s182
          %s184 = sshll.u32 %s173, 4
          %s185 = int_to_ptr.vmem [resolvable:$true] %s184
          %190 = dma.hbm_to_vmem [thread:$0]  %s183, 256, %s185, %s170, 128, 128, 8
        $region28: #{tpu_custom_call.1} parent=23 // pred_fallthru
          _
      $region24: #{tpu_custom_call.1} parent=5 // pred_fallthru
        _
      %p191 = scmp.le.s32.totalorder 1, %s17
      %p192 = scmp.lt.s32.totalorder %s17, 3
      %p193 = pnand %p191, %p192
      %p194 = pneg %p193
      // Predicated region
      $region29: #{tpu_custom_call.1} parent=5 // pred_check
        _
      $region30: #{tpu_custom_call.1} parent=5 // pred_check_branch
        %196 = sbr.rel (%p193) target = $region32
      $region31: #{tpu_custom_call.1} parent=5 // pred_region
        %s197 = ssub.s32 %s17, 1
        // Predicated region
        $region33: #{tpu_custom_call.1} parent=31 // pred_check
          %p198 = pneg %p50
        $region34: #{tpu_custom_call.1} parent=31 // pred_check_branch
          %200 = sbr.rel (%p198) target = $region36
        $region35: #{tpu_custom_call.1} parent=31 // pred_region
          %202 = dma.done [#allocation5], 32
        $region36: #{tpu_custom_call.1} parent=31 // pred_fallthru
          _
        // Predicated region
        $region37: #{tpu_custom_call.1} parent=31 // pred_check
          %p203 = pneg %p71
        $region38: #{tpu_custom_call.1} parent=31 // pred_check_branch
          %205 = sbr.rel (%p203) target = $region40
        $region39: #{tpu_custom_call.1} parent=31 // pred_region
          %207 = dma.done [#allocation7], 16
        $region40: #{tpu_custom_call.1} parent=31 // pred_fallthru
          _
        %s208 = sand.u32 %s86, 1
        %s209 = scalar_lea.sflag [#allocation3], %s208
        %s210 = sand.u32 %s86, 1
        %s211 = smul.addr %s210, 16
        %s212 = scalar_lea.vmem [#allocation8], %s211
        // Predicated region
        $region41: #{tpu_custom_call.1} parent=31 // pred_check
          %p213 = pneg %p99
        $region42: #{tpu_custom_call.1} parent=31 // pred_check_branch
          %215 = sbr.rel (%p213) target = $region44
        $region43: #{tpu_custom_call.1} parent=31 // pred_region
          %217 = dma.done %s209, 256
        $region44: #{tpu_custom_call.1} parent=31 // pred_fallthru
          _
        %218 = sfence
        %p219 = pneg %p50
        %p220 = pneg %p47
        %p221 = pneg %p71
        %p222 = pneg %p68
        %s223 = sand.u32 %s86, 1
        %s224 = scalar_lea.sflag [#allocation3], %s223
        %s225 = sand.u32 %s86, 1
        %s226 = smul.addr %s225, 16
        %s227 = scalar_lea.vmem [#allocation8], %s226
        %p228 = pneg %p99
        %p229 = pneg %p96
        %p230 = pneg %p127
        %p231 = pneg %p124
        %s232 = sand.u32 %s114, 1
        %s233 = scalar_lea.sflag [#allocation4], %s232
        %s234 = sand.u32 %s114, 1
        %s235 = smul.addr %s234, 8
        %s236 = scalar_lea.vmem [#allocation9], %s235
        %s237 = smul.u32 2, %s26
        %s238 = smul.u32 2, %s27
        %s239 = smul.u32 2, %s26
        %s240 = smul.u32 2, %s27
        %v241 = vld [vmem:[%s212] ss:$4 sm:$0x3]
        %s242 = sld [smem:[#allocation2]]
        %v243 = vstv %s242
        %v244 = vmul.f32 %v241, %v243
        %s245 = sld [smem:[#allocation6]]
        %v246 = vstv %s245
        %v247 = vadd.f32 %v244, %v246
        %s248 = scalar_lea.vmem %s212, 1 [#allocation8]
        %v249 = vld [vmem:[%s248] ss:$4 sm:$0x3]
        %s250 = sld [smem:[#allocation2 + $0x1]]
        %v251 = vstv %s250
        %v252 = vmul.f32 %v249, %v251
        %v253 = vadd.f32 %v247, %v252
        %s254 = scalar_lea.vmem %s212, 2 [#allocation8]
        %v255 = vld [vmem:[%s254] ss:$4 sm:$0x3]
        %s256 = sld [smem:[#allocation2 + $0x2]]
        %v257 = vstv %s256
        %v258 = vmul.f32 %v255, %v257
        %v259 = vadd.f32 %v253, %v258
        %s260 = scalar_lea.vmem %s212, 3 [#allocation8]
        %v261 = vld [vmem:[%s260] ss:$4 sm:$0x3]
        %s262 = sld [smem:[#allocation2 + $0x3]]
        %v263 = vstv %s262
        %v264 = vmul.f32 %v261, %v263
        %v265 = vadd.f32 %v259, %v264
        %v266 = vlaneseq
        %vm267 = vcmp.ge.s32.totalorder %v266, 0
        %vm268 = vcmp.lt.s32.totalorder %v266, 256
        %vm269 = vmand %vm267, %vm268
        %270 = vst.msk [vmem:[%s236] ss:$2 sm:$0x3] %vm269, %v265
        %v271 = vld [vmem:[%s212] ss:$4 sm:$0x3]
        %s272 = sld [smem:[#allocation2 + $0x80]]
        %v273 = vstv %s272
        %v274 = vmul.f32 %v271, %v273
        %s275 = sld [smem:[#allocation6 + $0x1]]
        %v276 = vstv %s275
        %v277 = vadd.f32 %v274, %v276
        %v278 = vld [vmem:[%s248] ss:$4 sm:$0x3]
        %s279 = sld [smem:[#allocation2 + $0x81]]
        %v280 = vstv %s279
        %v281 = vmul.f32 %v278, %v280
        %v282 = vadd.f32 %v277, %v281
        %v283 = vld [vmem:[%s254] ss:$4 sm:$0x3]
        %s284 = sld [smem:[#allocation2 + $0x82]]
        %v285 = vstv %s284
        %v286 = vmul.f32 %v283, %v285
        %v287 = vadd.f32 %v282, %v286
        %v288 = vld [vmem:[%s260] ss:$4 sm:$0x3]
        %s289 = sld [smem:[#allocation2 + $0x83]]
        %v290 = vstv %s289
        %v291 = vmul.f32 %v288, %v290
        %v292 = vadd.f32 %v287, %v291
        %s293 = scalar_lea.vmem %s236, 1 [#allocation9]
        %294 = vst.msk [vmem:[%s293] ss:$2 sm:$0x3] %vm269, %v292
        %s295 = scalar_lea.vmem %s212, 8 [#allocation8]
        %v296 = vld [vmem:[%s295] ss:$4 sm:$0x3]
        %s297 = sld [smem:[#allocation2]]
        %v298 = vstv %s297
        %v299 = vmul.f32 %v296, %v298
        %s300 = sld [smem:[#allocation6]]
        %v301 = vstv %s300
        %v302 = vadd.f32 %v299, %v301
        %s303 = scalar_lea.vmem %s295, 1 [#allocation8]
        %v304 = vld [vmem:[%s303] ss:$4 sm:$0x3]
        %s305 = sld [smem:[#allocation2 + $0x1]]
        %v306 = vstv %s305
        %v307 = vmul.f32 %v304, %v306
        %v308 = vadd.f32 %v302, %v307
        %s309 = scalar_lea.vmem %s295, 2 [#allocation8]
        %v310 = vld [vmem:[%s309] ss:$4 sm:$0x3]
        %s311 = sld [smem:[#allocation2 + $0x2]]
        %v312 = vstv %s311
        %v313 = vmul.f32 %v310, %v312
        %v314 = vadd.f32 %v308, %v313
        %s315 = scalar_lea.vmem %s295, 3 [#allocation8]
        %v316 = vld [vmem:[%s315] ss:$4 sm:$0x3]
        %s317 = sld [smem:[#allocation2 + $0x3]]
        %v318 = vstv %s317
        %v319 = vmul.f32 %v316, %v318
        %v320 = vadd.f32 %v314, %v319
        %s321 = scalar_lea.vmem %s236, 4 [#allocation9]
        %322 = vst.msk [vmem:[%s321] ss:$2 sm:$0x3] %vm269, %v320
        %v323 = vld [vmem:[%s295] ss:$4 sm:$0x3]
        %s324 = sld [smem:[#allocation2 + $0x80]]
        %v325 = vstv %s324
        %v326 = vmul.f32 %v323, %v325
        %s327 = sld [smem:[#allocation6 + $0x1]]
        %v328 = vstv %s327
        %v329 = vadd.f32 %v326, %v328
        %v330 = vld [vmem:[%s303] ss:$4 sm:$0x3]
        %s331 = sld [smem:[#allocation2 + $0x81]]
        %v332 = vstv %s331
        %v333 = vmul.f32 %v330, %v332
        %v334 = vadd.f32 %v329, %v333
        %v335 = vld [vmem:[%s309] ss:$4 sm:$0x3]
        %s336 = sld [smem:[#allocation2 + $0x82]]
        %v337 = vstv %s336
        %v338 = vmul.f32 %v335, %v337
        %v339 = vadd.f32 %v334, %v338
        %v340 = vld [vmem:[%s315] ss:$4 sm:$0x3]
        %s341 = sld [smem:[#allocation2 + $0x83]]
        %v342 = vstv %s341
        %v343 = vmul.f32 %v340, %v342
        %v344 = vadd.f32 %v339, %v343
        %s345 = scalar_lea.vmem %s321, 1 [#allocation9]
        %346 = vst.msk [vmem:[%s345] ss:$2 sm:$0x3] %vm269, %v344
        %s347 = sand.u32 %s114, 1
        %s348 = scalar_lea.sflag [#allocation4], %s347
        %s349 = sand.u32 %s114, 1
        %s350 = smul.addr %s349, 8
        %s351 = scalar_lea.vmem [#allocation9], %s350
        // Predicated region
        $region45: #{tpu_custom_call.1} parent=31 // pred_check
          %p352 = pneg %p124
        $region46: #{tpu_custom_call.1} parent=31 // pred_check_branch
          %354 = sbr.rel (%p352) target = $region48
        $region47: #{tpu_custom_call.1} parent=31 // pred_region
          %s355 = smul.u32 2, %s26
          %s356 = smul.u32 2, %s27
          %358 = vsyncadd %s348, 0
          %s359 = smul.addr %s355, 2
          %s360 = sadd.s32 %s356, %s359
          %s361 = smul.addr %s360, 2
          %s362 = scalar_lea.hbm %s3, %s361
          %s363 = sshll.u32 %s351, 4
          %s364 = int_to_ptr.vmem [resolvable:$true] %s363
          %s365 = sshll.u32 %s362, 4
          %s366 = int_to_ptr.hbm [resolvable:$true] %s365
          %371 = dma.vmem_to_hbm [thread:$0]  %s364, 128, %s366, %s348, 64, 64, 4
        $region48: #{tpu_custom_call.1} parent=31 // pred_fallthru
          _
      $region32: #{tpu_custom_call.1} parent=5 // pred_fallthru
        _
      %p372 = scmp.le.s32.totalorder 2, %s17
      // Predicated region
      $region49: #{tpu_custom_call.1} parent=5 // pred_check
        %p373 = pneg %p372
      $region50: #{tpu_custom_call.1} parent=5 // pred_check_branch
        %375 = sbr.rel (%p373) target = $region52
      $region51: #{tpu_custom_call.1} parent=5 // pred_region
        %s376 = ssub.s32 %s17, 2
        // Predicated region
        $region53: #{tpu_custom_call.1} parent=51 // pred_check
          %p377 = pneg %p130
        $region54: #{tpu_custom_call.1} parent=51 // pred_check_branch
          %379 = sbr.rel (%p377) target = $region56
        $region55: #{tpu_custom_call.1} parent=51 // pred_region
          %s380 = sand.u32 %s115, 1
          %s381 = scalar_lea.sflag [#allocation4], %s380
          %s382 = sand.u32 %s115, 1
          %s383 = smul.addr %s382, 8
          %s384 = scalar_lea.vmem [#allocation9], %s383
          %386 = dma.done %s381, 128
        $region56: #{tpu_custom_call.1} parent=51 // pred_fallthru
          _
      $region52: #{tpu_custom_call.1} parent=5 // pred_fallthru
        _
    $region6: #{tpu_custom_call.1} parent=1 // loop_footer
      %s21 = sadd.s32 1, %s17
    $region7: #{tpu_custom_call.1} parent=1 // loop_footer_branch
      %16 = sbr.rel target = $region3
    $region8: #{tpu_custom_call.1} parent=1 // loop_exit
      _
    %387 = vsyncpa [#allocation3], 1
    %s388 = scalar_lea.sflag [#allocation3], 1
    %389 = vsyncpa %s388, 1
    %390 = vsyncpa [#allocation4], 1
    %s391 = scalar_lea.sflag [#allocation4], 1
    %392 = vsyncpa %s391, 1
    %393 = vsyncpa [#allocation5], 1
    %s394 = scalar_lea.sflag [#allocation5], 1
    %395 = vsyncpa %s394, 1
    %396 = vsyncpa [#allocation7], 1

</llo_original>
